<compile_context>
chip_gen: v5e
topology: v5e:2x2
jax: 0.10.0
libtpu: 0.0.40
codegen_flags: <defaults>
</compile_context>

<pallas_src>
import jax
import jax.numpy as jnp
from jax.experimental import pallas as pl
from jax.experimental.pallas import tpu as pltpu

_LANE = 128          # lane width
_SUB = 8             # sublane granularity
_TB_GRAN = _SUB * _LANE   # 1024: batch-tile granularity keeping out block sublane-aligned


def network_kernel(x_ref, w1_ref, w2_ref, c_ref, o_ref):
    """One batch tile of relu(x@W1+b1) -> relu(.@W2+b2) -> (.@w3 + b3).

    x_ref : [TB, F]        f32  raw (unpadded) input rows, batch-streamed
    w1_ref: [F, 128]       f32  layer-1 weight, out-dim zero-padded (resident)
    w2_ref: [128, 128]     bf16 layer-2 weight, zero-padded         (resident)
    c_ref : [8, 128]       f32  row 0=b1, 1=b2, 2=w3(row), 3=b3(broadcast)
    o_ref : [TB//128, 128] f32  lane-dense output; row-major flatten == [TB, 1]
    """
    x = x_ref[...]                                           # [TB, F] f32

    # Layer 1 (13 -> 64, outputs zero-padded to 128). K = F dot on the MXU
    # (Mosaic masks the ragged contraction dim); f32 operands, f32 acc.
    h1 = jnp.dot(x, w1_ref[...], preferred_element_type=jnp.float32)
    h1 = jnp.maximum(h1 + c_ref[0:1, :], 0.0)                # bias + ReLU in f32
    # (dropout == identity in inference)

    # Layer 2 (64 -> 16, zero-padded to 128x128), bf16 MXU matmul, f32 acc.
    h2 = jnp.dot(h1.astype(jnp.bfloat16), w2_ref[...],
                 preferred_element_type=jnp.float32)
    h2 = jnp.maximum(h2 + c_ref[1:2, :], 0.0)                # f32

    # Layer 3 (16 -> 1) on the VPU/XLU: broadcast multiply + lane reduction.
    # Group 128 consecutive rows before reducing so the store is a dense
    # 128-lane write instead of a masked 1-wide column store.
    prod = h2 * c_ref[2:3, :]                                # [TB, 128] f32
    tb = prod.shape[0]
    out = jnp.sum(prod.reshape(tb // _LANE, _LANE, _LANE), axis=-1)
    o_ref[...] = (out + c_ref[3:4, :]).astype(o_ref.dtype)   # + b3 (broadcast row)


def _round_up(n, m):
    return ((n + m - 1) // m) * m


def _choose_batch_tiling(B, tb):
    """Pick (TB, B_pad): TB | B_pad, TB % 128 == 0, and the lane-dense output
    block (TB//128, 128) is sublane-legal (TB % 1024 == 0 unless single-step).
    Keeps >= 2 grid steps when the batch permits (v7x has 2 TensorCores)."""
    B_pad = max(_LANE, _round_up(B, _LANE))
    tb = max(_TB_GRAN, _round_up(tb, _TB_GRAN))
    if B_pad < 2 * _TB_GRAN:
        return B_pad, B_pad                      # single grid step, full-array out block
    TB = min(tb, (B_pad // 2) // _TB_GRAN * _TB_GRAN)   # >= 2 steps for megacore
    B_pad = _round_up(B_pad, TB)
    return TB, B_pad


def network_forward(x, params, *, tb=2048):
    """Inference forward of `Network`. x: [B, input_size] f32 -> [B, 1] f32."""
    B, F = x.shape
    w1, b1 = params["w1"], params["b1"]
    w2, b2 = params["w2"], params["b2"]
    w3, b3 = params["w3"], params["b3"]
    H1, H2 = w1.shape[1], w2.shape[1]
    assert H1 <= _LANE and H2 <= _LANE and w3.shape == (H2, 1)

    TB, B_pad = _choose_batch_tiling(B, tb)
    grid = (B_pad // TB,)

    # x stays raw f32 [B, F]: no lane padding / dtype cast in the wrapper, so
    # the only HBM traffic scaling with B is ~4*F bytes/row in + 4 bytes out.
    if B_pad != B:
        x = jnp.pad(x, ((0, B_pad - B), (0, 0)))

    # Tiny, batch-independent constants (VMEM-resident across all grid steps):
    # padded weights + one f32 [8,128] slab holding b1 / b2 / w3-row / b3.
    w1p = jnp.pad(w1, ((0, 0), (0, _LANE - H1)))                           # f32 [F,128]
    w2p = jnp.pad(w2, ((0, _LANE - H1), (0, _LANE - H2))).astype(jnp.bfloat16)
    consts = jnp.zeros((8, _LANE), jnp.float32)
    consts = consts.at[0, :H1].set(b1.reshape(-1))
    consts = consts.at[1, :H2].set(b2.reshape(-1))
    consts = consts.at[2, :H2].set(w3.reshape(-1))
    consts = consts.at[3, :].set(b3.reshape(()))                           # b3 broadcast

    cost = pl.CostEstimate(
        flops=2 * B * (F * H1 + H1 * H2 + H2),
        transcendentals=0,
        bytes_accessed=B * F * 4 + B * 4
        + (F * H1 + H1 * H2 + H2 + H1 + H2 + 1) * 4,
    )

    cp_kwargs = dict(dimension_semantics=("parallel",))
    if TB > 4096:  # only relevant for very large caller-swept tiles (v5e scoped VMEM = 16 MiB)
        cp_kwargs["vmem_limit_bytes"] = 32 * 1024 * 1024

    out = pl.pallas_call(
        network_kernel,
        out_shape=jax.ShapeDtypeStruct((B_pad // _LANE, _LANE), jnp.float32),
        grid=grid,
        in_specs=[
            pl.BlockSpec((TB, F), lambda i: (i, 0)),          # x: batch-streamed, pipelined
            pl.BlockSpec((F, _LANE), lambda i: (0, 0)),       # W1 (resident)
            pl.BlockSpec((_LANE, _LANE), lambda i: (0, 0)),   # W2 (resident)
            pl.BlockSpec((8, _LANE), lambda i: (0, 0)),       # b1/b2/w3/b3 slab (resident)
        ],
        out_specs=pl.BlockSpec((TB // _LANE, _LANE), lambda i: (i, 0)),
        compiler_params=pltpu.CompilerParams(**cp_kwargs),
        cost_estimate=cost,
    )(x, w1p, w2p, consts)

    # Row-major flatten of the lane-dense [B_pad//128, 128] result == [B_pad, 1].
    return out.reshape(B_pad, 1)[:B]


def init_params(key, input_size=13, hidden_sizes=(64, 16)):
    """Deterministic synthetic parameters matching Network(input_size, hidden_sizes)."""
    sizes = [input_size] + list(hidden_sizes) + [1]  # 13 -> 64 -> 16 -> 1
    params = {}
    for i in range(3):
        k_w, k_b, key = jax.random.split(key, 3)
        fan_in, fan_out = sizes[i], sizes[i + 1]
        bound = 1.0 / jnp.sqrt(fan_in)
        params[f"w{i+1}"] = jax.random.uniform(
            k_w, (fan_in, fan_out), jnp.float32, -bound, bound)
        params[f"b{i+1}"] = jax.random.uniform(
            k_b, (1, fan_out), jnp.float32, -bound, bound)
    return params


def reference_forward(x, p):
    """Pure-JAX reference mirroring the kernel's precision (layer 2 in bf16)."""
    h1 = jnp.maximum(
        jnp.dot(x, p["w1"], preferred_element_type=jnp.float32) + p["b1"], 0.0)
    h2 = jnp.maximum(
        jnp.dot(h1.astype(jnp.bfloat16), p["w2"].astype(jnp.bfloat16),
                preferred_element_type=jnp.float32) + p["b2"], 0.0)
    return jnp.sum(h2 * p["w3"][:, 0][None, :], axis=-1, keepdims=True) + p["b3"]


if __name__ == "__main__":
    key = jax.random.PRNGKey(0)
    k_x, k_p = jax.random.split(key)

    INPUT_SIZE = 13
    params = init_params(k_p, input_size=INPUT_SIZE, hidden_sizes=(64, 16))
    fwd = jax.jit(network_forward)

    # B=64   : single-step grid (whole batch in one lane-dense block)
    # B=2100 : ragged batch + multi-step grid (exercises the batch pipeline)
    for B in (64, 2100):
        kx = jax.random.fold_in(k_x, B)
        x = jax.random.normal(kx, (B, INPUT_SIZE), jnp.float32)
        out = jax.block_until_ready(fwd(x, params))
        ref = reference_forward(x, params)
        assert out.shape == (B, 1), out.shape
        assert jnp.allclose(out, ref, atol=1e-2, rtol=1e-2), (
            f"B={B}: max abs err {jnp.max(jnp.abs(out - ref))}")

    print("KERNEL_OK")
</pallas_src>

<mosaic_0001>
module attributes {stable_mosaic.version = 11 : i64} {
  func.func @network_kernel(%arg0: i32, %arg1: memref<128x13xf32, #tpu.memory_space<vmem>>, %arg2: memref<13x128xf32, #tpu.memory_space<vmem>>, %arg3: memref<128x128xbf16, #tpu.memory_space<vmem>>, %arg4: memref<8x128xf32, #tpu.memory_space<vmem>>, %arg5: memref<1x128xf32, #tpu.memory_space<vmem>>) attributes {dimension_semantics = [#tpu.dimension_semantics<parallel>], iteration_bounds = array<i64: 1>, scalar_prefetch = 0 : i64, scratch_operands = 0 : i64, tpu.core_type = #tpu.core_type<tc>, window_params = [{transform_indices = @transform_0, window_bounds = array<i64: 128, 13>}, {pipeline_mode = #tpu.pipeline_mode<synchronous>, transform_indices = @transform_1, window_bounds = array<i64: 13, 128>}, {pipeline_mode = #tpu.pipeline_mode<synchronous>, transform_indices = @transform_2, window_bounds = array<i64: 128, 128>}, {pipeline_mode = #tpu.pipeline_mode<synchronous>, transform_indices = @transform_3, window_bounds = array<i64: 8, 128>}, {transform_indices = @transform_4, window_bounds = array<i64: 1, 128>}]} {
    %c0 = arith.constant 0 : index
    %c0_0 = arith.constant 0 : index
    %0 = vector.load %arg1[%c0, %c0_0] : memref<128x13xf32, #tpu.memory_space<vmem>>, vector<128x13xf32>
    %c0_1 = arith.constant 0 : index
    %c0_2 = arith.constant 0 : index
    %1 = vector.load %arg2[%c0_1, %c0_2] : memref<13x128xf32, #tpu.memory_space<vmem>>, vector<13x128xf32>
    %cst = arith.constant dense<0.000000e+00> : vector<128x128xf32>
    %2 = tpu.matmul %0, %1, %cst {dimension_numbers = #tpu.dot_dimension_numbers<[1], [0], [0], [1], [0, 0, 1, 1], [], []>} : vector<128x13xf32>, vector<13x128xf32>, vector<128x128xf32> -> vector<128x128xf32>
    %c0_3 = arith.constant 0 : index
    %c0_4 = arith.constant 0 : index
    %3 = vector.load %arg4[%c0_3, %c0_4] : memref<8x128xf32, #tpu.memory_space<vmem>>, vector<1x128xf32>
    %4 = vector.broadcast %3 : vector<1x128xf32> to vector<128x128xf32>
    %5 = arith.addf %2, %4 : vector<128x128xf32>
    %cst_5 = arith.constant 0.000000e+00 : f32
    %6 = vector.broadcast %cst_5 : f32 to vector<128x128xf32>
    %7 = arith.maximumf %5, %6 : vector<128x128xf32>
    %8 = arith.truncf %7 : vector<128x128xf32> to vector<128x128xbf16>
    %c0_6 = arith.constant 0 : index
    %c0_7 = arith.constant 0 : index
    %9 = vector.load %arg3[%c0_6, %c0_7] : memref<128x128xbf16, #tpu.memory_space<vmem>>, vector<128x128xbf16>
    %cst_8 = arith.constant dense<0.000000e+00> : vector<128x128xf32>
    %10 = tpu.matmul %8, %9, %cst_8 {dimension_numbers = #tpu.dot_dimension_numbers<[1], [0], [0], [1], [0, 0, 1, 1], [], []>} : vector<128x128xbf16>, vector<128x128xbf16>, vector<128x128xf32> -> vector<128x128xf32>
    %c1 = arith.constant 1 : index
    %c0_9 = arith.constant 0 : index
    %11 = vector.load %arg4[%c1, %c0_9] : memref<8x128xf32, #tpu.memory_space<vmem>>, vector<1x128xf32>
    %12 = vector.broadcast %11 : vector<1x128xf32> to vector<128x128xf32>
    %13 = arith.addf %10, %12 : vector<128x128xf32>
    %cst_10 = arith.constant 0.000000e+00 : f32
    %14 = vector.broadcast %cst_10 : f32 to vector<128x128xf32>
    %15 = arith.maximumf %13, %14 : vector<128x128xf32>
    %c2 = arith.constant 2 : index
    %c0_11 = arith.constant 0 : index
    %16 = vector.load %arg4[%c2, %c0_11] : memref<8x128xf32, #tpu.memory_space<vmem>>, vector<1x128xf32>
    %17 = vector.broadcast %16 : vector<1x128xf32> to vector<128x128xf32>
    %18 = arith.mulf %15, %17 : vector<128x128xf32>
    %19 = vector.shape_cast %18 : vector<128x128xf32> to vector<1x128x128xf32>
    %cst_12 = arith.constant dense<0.000000e+00> : vector<1x128xf32>
    %20 = vector.multi_reduction <add>, %19, %cst_12 [2] : vector<1x128x128xf32> to vector<1x128xf32>
    %c3 = arith.constant 3 : index
    %c0_13 = arith.constant 0 : index
    %21 = vector.load %arg4[%c3, %c0_13] : memref<8x128xf32, #tpu.memory_space<vmem>>, vector<1x128xf32>
    %22 = arith.addf %20, %21 : vector<1x128xf32>
    %c0_14 = arith.constant 0 : index
    %c0_15 = arith.constant 0 : index
    %23 = vector.load %arg5[%c0_14, %c0_15] : memref<1x128xf32, #tpu.memory_space<vmem>>, vector<1x128xf32>
    tpu.vector_store %arg5[%c0_14, %c0_15], %22 {strides = array<i32>} : memref<1x128xf32, #tpu.memory_space<vmem>>, vector<1x128xf32>,
    return
  }
  func.func @transform_0(%arg0: i32) -> (i32, i32) {
    %c0_i32 = arith.constant 0 : i32
    %c0_i32_0 = arith.constant 0 : i32
    return %arg0, %c0_i32 : i32, i32
  }
  func.func @transform_1(%arg0: i32) -> (i32, i32) {
    %c0_i32 = arith.constant 0 : i32
    %c0_i32_0 = arith.constant 0 : i32
    %c0_i32_1 = arith.constant 0 : i32
    return %c0_i32, %c0_i32_0 : i32, i32
  }
  func.func @transform_2(%arg0: i32) -> (i32, i32) {
    %c0_i32 = arith.constant 0 : i32
    %c0_i32_0 = arith.constant 0 : i32
    %c0_i32_1 = arith.constant 0 : i32
    return %c0_i32, %c0_i32_0 : i32, i32
  }
  func.func @transform_3(%arg0: i32) -> (i32, i32) {
    %c0_i32 = arith.constant 0 : i32
    %c0_i32_0 = arith.constant 0 : i32
    %c0_i32_1 = arith.constant 0 : i32
    return %c0_i32, %c0_i32_0 : i32, i32
  }
  func.func @transform_4(%arg0: i32) -> (i32, i32) {
    %c0_i32 = arith.constant 0 : i32
    %c0_i32_0 = arith.constant 0 : i32
    return %arg0, %c0_i32 : i32, i32
  }
}

</mosaic_0001>

<llo_original>
// kernel: network_forward.1
$region0: #{network_forward.1}
  #allocation0 [shape = 'u32[]', space=smem, size = 0x4, offset = 0x4, fixed_abs, tag = 'smem constant byte address 0x4 - core index']
  #allocation1 [shape = 'u32[72,128]{1,0:T(1,128)}', space=vmem, size = 0x9000, scoped, tag = 'internal scratch']
  %s0 = inlined_call_operand.vmem [shape: f32[128,13], index: 0, kind: input, shape index: {}]
  %s1 = inlined_call_operand.vmem [shape: f32[13,128], index: 1, kind: input, shape index: {}]
  %s2 = inlined_call_operand.vmem [shape: bf16[128,128], index: 2, kind: input, shape index: {}]
  %s3 = inlined_call_operand.vmem [shape: f32[8,128], index: 3, kind: input, shape index: {}]
  %s4 = inlined_call_operand.vmem [shape: f32[1,128], index: 4, kind: output, shape index: {}]
  %s5 = sld [smem:[#allocation0]]
  $region26: #{network_forward.1} parent=0
    _
  %s7 = ssub.s32 1, %s5
  %s8 = scalar_select 0, %s7, %s5
  // Predicated region
  $region2: #{network_forward.1} parent=0 // pred_check
    _
  $region3: #{network_forward.1} parent=0 // pred_check_branch
    %10 = sbr.rel (0) target = $region5
  $region4: #{network_forward.1} parent=0 // pred_region
    _
  $region5: #{network_forward.1} parent=0 // pred_fallthru
    _
  // Predicated region
  $region6: #{network_forward.1} parent=0 // pred_check
    _
  $region7: #{network_forward.1} parent=0 // pred_check_branch
    %12 = sbr.rel (0) target = $region9
  $region8: #{network_forward.1} parent=0 // pred_region
    _
  $region9: #{network_forward.1} parent=0 // pred_fallthru
    _
  // Predicated region
  $region10: #{network_forward.1} parent=0 // pred_check
    _
  $region11: #{network_forward.1} parent=0 // pred_check_branch
    %14 = sbr.rel (0) target = $region13
  $region12: #{network_forward.1} parent=0 // pred_region
    _
  $region13: #{network_forward.1} parent=0 // pred_fallthru
    _
  // Predicated region
  $region14: #{network_forward.1} parent=0 // pred_check
    _
  $region15: #{network_forward.1} parent=0 // pred_check_branch
    %16 = sbr.rel (0) target = $region17
  $region16: #{network_forward.1} parent=0 // pred_region
    _
  $region17: #{network_forward.1} parent=0 // pred_fallthru
    _
  %v17 = vld [vmem:[%s0] sm:$0xff]
  %v18 = vld [vmem:[%s0 + $0x8] sm:$0xff]
  %v19 = vld [vmem:[%s0 + $0x10] sm:$0xff]
  %v20 = vld [vmem:[%s0 + $0x18] sm:$0xff]
  %v21 = vld [vmem:[%s0 + $0x20] sm:$0xff]
  %v22 = vld [vmem:[%s0 + $0x28] sm:$0xff]
  %v23 = vld [vmem:[%s0 + $0x30] sm:$0xff]
  %v24 = vld [vmem:[%s0 + $0x38] sm:$0xff]
  %v25 = vld [vmem:[%s0 + $0x40] sm:$0xff]
  %v26 = vld [vmem:[%s0 + $0x48] sm:$0xff]
  %v27 = vld [vmem:[%s0 + $0x50] sm:$0xff]
  %v28 = vld [vmem:[%s0 + $0x58] sm:$0xff]
  %v29 = vld [vmem:[%s0 + $0x60] sm:$0xff]
  %v30 = vld [vmem:[%s0 + $0x68] sm:$0xff]
  %v31 = vld [vmem:[%s0 + $0x70] sm:$0xff]
  %v32 = vld [vmem:[%s0 + $0x78] sm:$0xff]
  %v33 = vld [vmem:[%s1] sm:$0xff]
  %v34 = vld [vmem:[%s1 + $0x8] sm:$0x1f]
  %v35 = vld [vmem:[%s3] sm:$0x1]
  %v36 = vperm.slane %v35, 0
  %vm37 = vcmask 105472
  %v39 = vsel %vm37, %v17, 0
  %v42 = vsel %vm37, %v18, 0
  %v45 = vsel %vm37, %v19, 0
  %v48 = vsel %vm37, %v20, 0
  %v51 = vsel %vm37, %v21, 0
  %v54 = vsel %vm37, %v22, 0
  %v57 = vsel %vm37, %v23, 0
  %v60 = vsel %vm37, %v24, 0
  %v63 = vsel %vm37, %v25, 0
  %v66 = vsel %vm37, %v26, 0
  %v69 = vsel %vm37, %v27, 0
  %v72 = vsel %vm37, %v28, 0
  %v75 = vsel %vm37, %v29, 0
  %v78 = vsel %vm37, %v30, 0
  %v81 = vsel %vm37, %v31, 0
  %v84 = vsel %vm37, %v32, 0
  %vm86 = vcmask 1044480
  %v88 = vsel %vm86, %v34, 0
  %90 = vmatpush.msra.mxu0 0.0
  %91 = vmatpush.msra.mxu0 0.0
  %92 = vmatpush.msra.mxu0 0.0
  %93 = vmatpush.msra.mxu0 0.0
  %94 = vmatpush.msra.mxu0 0.0
  %95 = vmatpush.msra.mxu0 0.0
  %96 = vmatpush.msra.mxu0 0.0
  %97 = vmatpush.msra.mxu0 0.0
  %98 = vmatpush.msra.mxu0 0.0
  %99 = vmatpush.msra.mxu0 0.0
  %100 = vmatpush.msra.mxu0 0.0
  %101 = vmatpush.msra.mxu0 0.0
  %102 = vmatpush.msra.mxu0 0.0
  %103 = vmatpush.msra.mxu0 0.0
  %104 = vmatpush.msra.mxu0 %v88
  %105 = vmatpush.msra.mxu0 %v33
  %106 = vmatmul.f32.gmra.mxu0 %v39
  %v107 = vpop.f32.mrf.mxu0
  %v108 = vadd.f32 %v36, %v107
  %109 = vmatmul.f32.gmra.mxu0 %v42
  %v110 = vpop.f32.mrf.mxu0
  %v111 = vadd.f32 %v36, %v110
  %112 = vmatmul.f32.gmra.mxu0 %v45
  %v113 = vpop.f32.mrf.mxu0
  %v114 = vadd.f32 %v36, %v113
  %115 = vmatmul.f32.gmra.mxu0 %v48
  %v116 = vpop.f32.mrf.mxu0
  %v117 = vadd.f32 %v36, %v116
  %118 = vmatmul.f32.gmra.mxu0 %v51
  %v119 = vpop.f32.mrf.mxu0
  %v120 = vadd.f32 %v36, %v119
  %121 = vmatmul.f32.gmra.mxu0 %v54
  %v122 = vpop.f32.mrf.mxu0
  %v123 = vadd.f32 %v36, %v122
  %124 = vmatmul.f32.gmra.mxu0 %v57
  %v125 = vpop.f32.mrf.mxu0
  %v126 = vadd.f32 %v36, %v125
  %127 = vmatmul.f32.gmra.mxu0 %v60
  %v128 = vpop.f32.mrf.mxu0
  %v129 = vadd.f32 %v36, %v128
  %130 = vmatmul.f32.gmra.mxu0 %v63
  %v131 = vpop.f32.mrf.mxu0
  %v132 = vadd.f32 %v36, %v131
  %133 = vmatmul.f32.gmra.mxu0 %v66
  %v134 = vpop.f32.mrf.mxu0
  %v135 = vadd.f32 %v36, %v134
  %136 = vmatmul.f32.gmra.mxu0 %v69
  %v137 = vpop.f32.mrf.mxu0
  %v138 = vadd.f32 %v36, %v137
  %139 = vmatmul.f32.gmra.mxu0 %v72
  %v140 = vpop.f32.mrf.mxu0
  %v141 = vadd.f32 %v36, %v140
  %142 = vmatmul.f32.gmra.mxu0 %v75
  %v143 = vpop.f32.mrf.mxu0
  %v144 = vadd.f32 %v36, %v143
  %145 = vmatmul.f32.gmra.mxu0 %v78
  %v146 = vpop.f32.mrf.mxu0
  %v147 = vadd.f32 %v36, %v146
  %148 = vmatmul.f32.gmra.mxu0 %v81
  %v149 = vpop.f32.mrf.mxu0
  %v150 = vadd.f32 %v36, %v149
  %151 = vmatmul.f32.gmra.mxu0 %v84
  %v152 = vpop.f32.mrf.mxu0
  %v153 = vadd.f32 %v36, %v152
  %154 = vdwg.mxu0
  %v155 = vmax.f32 %v108, 0.0
  %v156 = vmax.f32 %v111, 0.0
  %v157 = vmax.f32 %v114, 0.0
  %v158 = vmax.f32 %v117, 0.0
  %v159 = vmax.f32 %v120, 0.0
  %v160 = vmax.f32 %v123, 0.0
  %v161 = vmax.f32 %v126, 0.0
  %v162 = vmax.f32 %v129, 0.0
  %v163 = vmax.f32 %v132, 0.0
  %v164 = vmax.f32 %v135, 0.0
  %v165 = vmax.f32 %v138, 0.0
  %v166 = vmax.f32 %v141, 0.0
  %v167 = vmax.f32 %v144, 0.0
  %v168 = vmax.f32 %v147, 0.0
  %v169 = vmax.f32 %v150, 0.0
  %v170 = vmax.f32 %v153, 0.0
  %v171 = vpack.c.bf16 %v156, %v155
  %v172 = vpack.c.bf16 %v158, %v157
  %v173 = vpack.c.bf16 %v160, %v159
  %v174 = vpack.c.bf16 %v162, %v161
  %v175 = vpack.c.bf16 %v164, %v163
  %v176 = vpack.c.bf16 %v166, %v165
  %v177 = vpack.c.bf16 %v168, %v167
  %v178 = vpack.c.bf16 %v170, %v169
  %v179 = vld [vmem:[%s2] sm:$0xf]
  %v180 = vld [vmem:[%s2 + $0x4] sm:$0xf]
  %v181 = vld [vmem:[%s2 + $0x8] sm:$0xf]
  %v182 = vld [vmem:[%s2 + $0xc] sm:$0xf]
  %v183 = vld [vmem:[%s2 + $0x10] sm:$0xf]
  %v184 = vld [vmem:[%s2 + $0x14] sm:$0xf]
  %v185 = vld [vmem:[%s2 + $0x18] sm:$0xf]
  %v186 = vld [vmem:[%s2 + $0x1c] sm:$0xf]
  %v187 = vld [vmem:[%s2 + $0x20] sm:$0xf]
  %v188 = vld [vmem:[%s2 + $0x24] sm:$0xf]
  %v189 = vld [vmem:[%s2 + $0x28] sm:$0xf]
  %v190 = vld [vmem:[%s2 + $0x2c] sm:$0xf]
  %v191 = vld [vmem:[%s2 + $0x30] sm:$0xf]
  %v192 = vld [vmem:[%s2 + $0x34] sm:$0xf]
  %v193 = vld [vmem:[%s2 + $0x38] sm:$0xf]
  %v194 = vld [vmem:[%s2 + $0x3c] sm:$0xf]
  %v195 = vld [vmem:[%s3 + $0x1] sm:$0x1]
  %v196 = vperm.slane %v195, 0
  %v213 = vunpack.c.l.b16 %v179
  %v214 = vunpack.c.l.b16 %v180
  %v215 = vunpack.c.l.b16 %v181
  %v216 = vunpack.c.l.b16 %v182
  %v217 = vunpack.c.l.b16 %v183
  %v218 = vunpack.c.l.b16 %v184
  %v219 = vunpack.c.l.b16 %v185
  %v220 = vunpack.c.l.b16 %v186
  %v221 = vunpack.c.l.b16 %v187
  %v222 = vunpack.c.l.b16 %v188
  %v223 = vunpack.c.l.b16 %v189
  %v224 = vunpack.c.l.b16 %v190
  %v225 = vunpack.c.l.b16 %v191
  %v226 = vunpack.c.l.b16 %v192
  %v227 = vunpack.c.l.b16 %v193
  %v228 = vunpack.c.l.b16 %v194
  %v229 = vpack.c.b16 %v214, %v213
  %v230 = vpack.c.b16 %v216, %v215
  %v231 = vpack.c.b16 %v218, %v217
  %v232 = vpack.c.b16 %v220, %v219
  %v233 = vpack.c.b16 %v222, %v221
  %v234 = vpack.c.b16 %v224, %v223
  %v235 = vpack.c.b16 %v226, %v225
  %v236 = vpack.c.b16 %v228, %v227
  %245 = vmatpush.bf16.msra.mxu0 %v236
  %246 = vmatpush.bf16.msra.mxu0 %v235
  %247 = vmatpush.bf16.msra.mxu0 %v234
  %248 = vmatpush.bf16.msra.mxu0 %v233
  %249 = vmatpush.bf16.msra.mxu0 %v232
  %250 = vmatpush.bf16.msra.mxu0 %v231
  %251 = vmatpush.bf16.msra.mxu0 %v230
  %252 = vmatpush.bf16.msra.mxu0 %v229
  %253 = vmatmul.bf16.gmra.mxu0 %v171
  %v254 = vpop.f32.mrf.mxu0
  %v255 = vadd.f32 %v196, %v254
  %v256 = vpop.f32.mrf.mxu0
  %v257 = vadd.f32 %v196, %v256
  %258 = vmatmul.bf16.gmra.mxu0 %v172
  %v259 = vpop.f32.mrf.mxu0
  %v260 = vadd.f32 %v196, %v259
  %v261 = vpop.f32.mrf.mxu0
  %v262 = vadd.f32 %v196, %v261
  %263 = vmatmul.bf16.gmra.mxu0 %v173
  %v264 = vpop.f32.mrf.mxu0
  %v265 = vadd.f32 %v196, %v264
  %v266 = vpop.f32.mrf.mxu0
  %v267 = vadd.f32 %v196, %v266
  %268 = vmatmul.bf16.gmra.mxu0 %v174
  %v269 = vpop.f32.mrf.mxu0
  %v270 = vadd.f32 %v196, %v269
  %v271 = vpop.f32.mrf.mxu0
  %v272 = vadd.f32 %v196, %v271
  %273 = vmatmul.bf16.gmra.mxu0 %v175
  %v274 = vpop.f32.mrf.mxu0
  %v275 = vadd.f32 %v196, %v274
  %v276 = vpop.f32.mrf.mxu0
  %v277 = vadd.f32 %v196, %v276
  %278 = vmatmul.bf16.gmra.mxu0 %v176
  %v279 = vpop.f32.mrf.mxu0
  %v280 = vadd.f32 %v196, %v279
  %v281 = vpop.f32.mrf.mxu0
  %v282 = vadd.f32 %v196, %v281
  %283 = vmatmul.bf16.gmra.mxu0 %v177
  %v284 = vpop.f32.mrf.mxu0
  %v285 = vadd.f32 %v196, %v284
  %v286 = vpop.f32.mrf.mxu0
  %v287 = vadd.f32 %v196, %v286
  %288 = vmatmul.bf16.gmra.mxu0 %v178
  %v289 = vpop.f32.mrf.mxu0
  %v290 = vadd.f32 %v196, %v289
  %v291 = vpop.f32.mrf.mxu0
  %v292 = vadd.f32 %v196, %v291
  %293 = vdwg.mxu0
  %v294 = vmax.f32 %v255, 0.0
  %v295 = vmax.f32 %v257, 0.0
  %v296 = vmax.f32 %v260, 0.0
  %v297 = vmax.f32 %v262, 0.0
  %v298 = vmax.f32 %v265, 0.0
  %v299 = vmax.f32 %v267, 0.0
  %v300 = vmax.f32 %v270, 0.0
  %v301 = vmax.f32 %v272, 0.0
  %v302 = vmax.f32 %v275, 0.0
  %v303 = vmax.f32 %v277, 0.0
  %v304 = vmax.f32 %v280, 0.0
  %v305 = vmax.f32 %v282, 0.0
  %v306 = vmax.f32 %v285, 0.0
  %v307 = vmax.f32 %v287, 0.0
  %v308 = vmax.f32 %v290, 0.0
  %v309 = vmax.f32 %v292, 0.0
  %v310 = vld [vmem:[%s3 + $0x2] sm:$0x1]
  %v311 = vperm.slane %v310, 0
  %v312 = vmul.f32 %v294, %v311
  %v313 = vmul.f32 %v295, %v311
  %v314 = vmul.f32 %v296, %v311
  %v315 = vmul.f32 %v297, %v311
  %v316 = vmul.f32 %v298, %v311
  %v317 = vmul.f32 %v299, %v311
  %v318 = vmul.f32 %v300, %v311
  %v319 = vmul.f32 %v301, %v311
  %v320 = vmul.f32 %v302, %v311
  %v321 = vmul.f32 %v303, %v311
  %v322 = vmul.f32 %v304, %v311
  %v323 = vmul.f32 %v305, %v311
  %v324 = vmul.f32 %v306, %v311
  %v325 = vmul.f32 %v307, %v311
  %v326 = vmul.f32 %v308, %v311
  %v327 = vmul.f32 %v309, %v311
  %328 = vadd.xlane.f32.xlu0 %v312
  %v329 = vpop.xlane.xlu0 %328
  %330 = vadd.xlane.f32.xlu0 %v313
  %v331 = vpop.xlane.xlu0 %330
  %332 = vadd.xlane.f32.xlu0 %v314
  %v333 = vpop.xlane.xlu0 %332
  %334 = vadd.xlane.f32.xlu0 %v315
  %v335 = vpop.xlane.xlu0 %334
  %336 = vadd.xlane.f32.xlu0 %v316
  %v337 = vpop.xlane.xlu0 %336
  %338 = vadd.xlane.f32.xlu0 %v317
  %v339 = vpop.xlane.xlu0 %338
  %340 = vadd.xlane.f32.xlu0 %v318
  %v341 = vpop.xlane.xlu0 %340
  %342 = vadd.xlane.f32.xlu0 %v319
  %v343 = vpop.xlane.xlu0 %342
  %344 = vadd.xlane.f32.xlu0 %v320
  %v345 = vpop.xlane.xlu0 %344
  %346 = vadd.xlane.f32.xlu0 %v321
  %v347 = vpop.xlane.xlu0 %346
  %348 = vadd.xlane.f32.xlu0 %v322
  %v349 = vpop.xlane.xlu0 %348
  %350 = vadd.xlane.f32.xlu0 %v323
  %v351 = vpop.xlane.xlu0 %350
  %352 = vadd.xlane.f32.xlu0 %v324
  %v353 = vpop.xlane.xlu0 %352
  %354 = vadd.xlane.f32.xlu0 %v325
  %v355 = vpop.xlane.xlu0 %354
  %356 = vadd.xlane.f32.xlu0 %v326
  %v357 = vpop.xlane.xlu0 %356
  %358 = vadd.xlane.f32.xlu0 %v327
  %v359 = vpop.xlane.xlu0 %358
  %v360 = vld [vmem:[%s3 + $0x3] sm:$0x1]
  %v362 = vperm.slane %v360, 0
  %v363 = vlaneseq
  %v364 = vshrl.u32 %v363, 7
  %366 = vset.pattern.permute.xlu0 %v364
  %367 = vperm.xlu0 %366, %v362
  %v368 = vpop.permute.xlu0 %367
  %v369 = vlaneseq
  %v370 = vshrl.u32 %v369, 7
  %v371 = vadd.s32 %v370, 8
  %372 = vset.pattern.permute.xlu0 %v371
  %373 = vperm.xlu0 %372, %v362
  %v374 = vpop.permute.xlu0 %373
  %v375 = vlaneseq
  %v376 = vshrl.u32 %v375, 7
  %v377 = vadd.s32 %v376, 16
  %378 = vset.pattern.permute.xlu0 %v377
  %379 = vperm.xlu0 %378, %v362
  %v380 = vpop.permute.xlu0 %379
  %v381 = vlaneseq
  %v382 = vshrl.u32 %v381, 7
  %v383 = vadd.s32 %v382, 24
  %384 = vset.pattern.permute.xlu0 %v383
  %385 = vperm.xlu0 %384, %v362
  %v386 = vpop.permute.xlu0 %385
  %v387 = vlaneseq
  %v388 = vshrl.u32 %v387, 7
  %v389 = vadd.s32 %v388, 32
  %390 = vset.pattern.permute.xlu0 %v389
  %391 = vperm.xlu0 %390, %v362
  %v392 = vpop.permute.xlu0 %391
  %v393 = vlaneseq
  %v394 = vshrl.u32 %v393, 7
  %v395 = vadd.s32 %v394, 40
  %396 = vset.pattern.permute.xlu0 %v395
  %397 = vperm.xlu0 %396, %v362
  %v398 = vpop.permute.xlu0 %397
  %v399 = vlaneseq
  %v400 = vshrl.u32 %v399, 7
  %v401 = vadd.s32 %v400, 48
  %402 = vset.pattern.permute.xlu0 %v401
  %403 = vperm.xlu0 %402, %v362
  %v404 = vpop.permute.xlu0 %403
  %v405 = vlaneseq
  %v406 = vshrl.u32 %v405, 7
  %v407 = vadd.s32 %v406, 56
  %408 = vset.pattern.permute.xlu0 %v407
  %409 = vperm.xlu0 %408, %v362
  %v410 = vpop.permute.xlu0 %409
  %v411 = vlaneseq
  %v412 = vshrl.u32 %v411, 7
  %v413 = vadd.s32 %v412, 64
  %414 = vset.pattern.permute.xlu0 %v413
  %415 = vperm.xlu0 %414, %v362
  %v416 = vpop.permute.xlu0 %415
  %v417 = vlaneseq
  %v418 = vshrl.u32 %v417, 7
  %v419 = vadd.s32 %v418, 72
  %420 = vset.pattern.permute.xlu0 %v419
  %421 = vperm.xlu0 %420, %v362
  %v422 = vpop.permute.xlu0 %421
  %v423 = vlaneseq
  %v424 = vshrl.u32 %v423, 7
  %v425 = vadd.s32 %v424, 80
  %426 = vset.pattern.permute.xlu0 %v425
  %427 = vperm.xlu0 %426, %v362
  %v428 = vpop.permute.xlu0 %427
  %v429 = vlaneseq
  %v430 = vshrl.u32 %v429, 7
  %v431 = vadd.s32 %v430, 88
  %432 = vset.pattern.permute.xlu0 %v431
  %433 = vperm.xlu0 %432, %v362
  %v434 = vpop.permute.xlu0 %433
  %v435 = vlaneseq
  %v436 = vshrl.u32 %v435, 7
  %v437 = vadd.s32 %v436, 96
  %438 = vset.pattern.permute.xlu0 %v437
  %439 = vperm.xlu0 %438, %v362
  %v440 = vpop.permute.xlu0 %439
  %v441 = vlaneseq
  %v442 = vshrl.u32 %v441, 7
  %v443 = vadd.s32 %v442, 104
  %444 = vset.pattern.permute.xlu0 %v443
  %445 = vperm.xlu0 %444, %v362
  %v446 = vpop.permute.xlu0 %445
  %v447 = vlaneseq
  %v448 = vshrl.u32 %v447, 7
  %v449 = vadd.s32 %v448, 112
  %450 = vset.pattern.permute.xlu0 %v449
  %451 = vperm.xlu0 %450, %v362
  %v452 = vpop.permute.xlu0 %451
  %v453 = vlaneseq
  %v454 = vshrl.u32 %v453, 7
  %v455 = vadd.s32 %v454, 120
  %456 = vset.pattern.permute.xlu0 %v455
  %457 = vperm.xlu0 %456, %v362
  %v458 = vpop.permute.xlu0 %457
  %v475 = vadd.f32 %v329, %v368
  %v476 = vadd.f32 %v331, %v374
  %v477 = vadd.f32 %v333, %v380
  %v478 = vadd.f32 %v335, %v386
  %v479 = vadd.f32 %v337, %v392
  %v480 = vadd.f32 %v339, %v398
  %v481 = vadd.f32 %v341, %v404
  %v482 = vadd.f32 %v343, %v410
  %v483 = vadd.f32 %v345, %v416
  %v484 = vadd.f32 %v347, %v422
  %v485 = vadd.f32 %v349, %v428
  %v486 = vadd.f32 %v351, %v434
  %v487 = vadd.f32 %v353, %v440
  %v488 = vadd.f32 %v355, %v446
  %v489 = vadd.f32 %v357, %v452
  %v490 = vadd.f32 %v359, %v458
  %507 = vset.pattern.permute.xlu0 0
  %508 = vperm.xlu0 %507, %v475
  %v509 = vpop.permute.xlu0 %508
  %510 = vset.pattern.permute.xlu0 0
  %511 = vperm.xlu0 %510, %v476
  %v512 = vpop.permute.xlu0 %511
  %513 = vset.pattern.permute.xlu0 0
  %514 = vperm.xlu0 %513, %v477
  %v515 = vpop.permute.xlu0 %514
  %516 = vset.pattern.permute.xlu0 0
  %517 = vperm.xlu0 %516, %v478
  %v518 = vpop.permute.xlu0 %517
  %519 = vset.pattern.permute.xlu0 0
  %520 = vperm.xlu0 %519, %v479
  %v521 = vpop.permute.xlu0 %520
  %522 = vset.pattern.permute.xlu0 0
  %523 = vperm.xlu0 %522, %v480
  %v524 = vpop.permute.xlu0 %523
  %525 = vset.pattern.permute.xlu0 0
  %526 = vperm.xlu0 %525, %v481
  %v527 = vpop.permute.xlu0 %526
  %528 = vset.pattern.permute.xlu0 0
  %529 = vperm.xlu0 %528, %v482
  %v530 = vpop.permute.xlu0 %529
  %531 = vset.pattern.permute.xlu0 0
  %532 = vperm.xlu0 %531, %v483
  %v533 = vpop.permute.xlu0 %532
  %534 = vset.pattern.permute.xlu0 0
  %535 = vperm.xlu0 %534, %v484
  %v536 = vpop.permute.xlu0 %535
  %537 = vset.pattern.permute.xlu0 0
  %538 = vperm.xlu0 %537, %v485
  %v539 = vpop.permute.xlu0 %538
  %540 = vset.pattern.permute.xlu0 0
  %541 = vperm.xlu0 %540, %v486
  %v542 = vpop.permute.xlu0 %541
  %543 = vset.pattern.permute.xlu0 0
  %544 = vperm.xlu0 %543, %v487
  %v545 = vpop.permute.xlu0 %544
  %546 = vset.pattern.permute.xlu0 0
  %547 = vperm.xlu0 %546, %v488
  %v548 = vpop.permute.xlu0 %547
  %549 = vset.pattern.permute.xlu0 0
  %550 = vperm.xlu0 %549, %v489
  %v551 = vpop.permute.xlu0 %550
  %552 = vset.pattern.permute.xlu0 0
  %553 = vperm.xlu0 %552, %v490
  %v554 = vpop.permute.xlu0 %553
  %v555 = vlaneseq
  %v556 = vand.u32 %v555, 127
  %v557 = vperm.slane %v509, %v556
  %v558 = vadd.s32 %v556, 4294967288
  %v559 = vperm.slane %v512, %v558
  %vm560 = vcmask 130112
  %v561 = vsel %vm560, %v559, %v557
  %v562 = vadd.s32 %v556, 4294967280
  %v563 = vperm.slane %v515, %v562
  %vm564 = vcmask 195712
  %v565 = vsel %vm564, %v563, %v561
  %v566 = vadd.s32 %v556, 4294967272
  %v567 = vperm.slane %v518, %v566
  %vm568 = vcmask 261312
  %v569 = vsel %vm568, %v567, %v565
  %v570 = vadd.s32 %v556, 4294967264
  %v571 = vperm.slane %v521, %v570
  %vm572 = vcmask 326912
  %v573 = vsel %vm572, %v571, %v569
  %v574 = vadd.s32 %v556, 4294967256
  %v575 = vperm.slane %v524, %v574
  %vm576 = vcmask 392512
  %v577 = vsel %vm576, %v575, %v573
  %v578 = vadd.s32 %v556, 4294967248
  %v579 = vperm.slane %v527, %v578
  %vm580 = vcmask 458112
  %v581 = vsel %vm580, %v579, %v577
  %v582 = vadd.s32 %v556, 4294967240
  %v583 = vperm.slane %v530, %v582
  %vm584 = vcmask 523712
  %v585 = vsel %vm584, %v583, %v581
  %v586 = vadd.s32 %v556, 4294967232
  %v587 = vperm.slane %v533, %v586
  %vm588 = vcmask 589312
  %v589 = vsel %vm588, %v587, %v585
  %v590 = vadd.s32 %v556, 4294967224
  %v591 = vperm.slane %v536, %v590
  %vm592 = vcmask 654912
  %v593 = vsel %vm592, %v591, %v589
  %v594 = vadd.s32 %v556, 4294967216
  %v595 = vperm.slane %v539, %v594
  %vm596 = vcmask 720512
  %v597 = vsel %vm596, %v595, %v593
  %v598 = vadd.s32 %v556, 4294967208
  %v599 = vperm.slane %v542, %v598
  %vm600 = vcmask 786112
  %v601 = vsel %vm600, %v599, %v597
  %v602 = vadd.s32 %v556, 4294967200
  %v603 = vperm.slane %v545, %v602
  %vm604 = vcmask 851712
  %v605 = vsel %vm604, %v603, %v601
  %v606 = vadd.s32 %v556, 4294967192
  %v607 = vperm.slane %v548, %v606
  %vm608 = vcmask 917312
  %v609 = vsel %vm608, %v607, %v605
  %v610 = vadd.s32 %v556, 4294967184
  %v611 = vperm.slane %v551, %v610
  %vm612 = vcmask 982912
  %v613 = vsel %vm612, %v611, %v609
  %v614 = vadd.s32 %v556, 4294967176
  %v615 = vperm.slane %v554, %v614
  %vm616 = vcmask 1048512
  %v617 = vsel %vm616, %v615, %v613
  %619 = vst [vmem:[%s4] sm:$0x1] %v617
  // Predicated region
  $region18: #{network_forward.1} parent=0 // pred_check
    _
  $region19: #{network_forward.1} parent=0 // pred_check_branch
    %621 = sbr.rel (0) target = $region21
  $region20: #{network_forward.1} parent=0 // pred_region
    _
  $region21: #{network_forward.1} parent=0 // pred_fallthru
    _
  // Predicated region
  $region22: #{network_forward.1} parent=0 // pred_check
    _
  $region23: #{network_forward.1} parent=0 // pred_check_branch
    %623 = sbr.rel (0) target = $region25
  $region24: #{network_forward.1} parent=0 // pred_region
    _
  $region25: #{network_forward.1} parent=0 // pred_fallthru
    _

</llo_original>
